<compile_context>
chip_gen: v5e
topology: v5e:2x2
jax: 0.10.0
libtpu: 0.0.40
codegen_flags: <defaults>
</compile_context>

<pallas_src>
import numpy as np
import jax
import jax.numpy as jnp
from jax.experimental import pallas as pl
from jax.experimental.pallas import tpu as pltpu

NH = 32  # hidden size (nh in the PyTorch module)


# --------------------------------------------------------------------- kernel

def _fused_kernel(x_ref, pos_ref, msk_ref, w1_ref, w2_ref, pe_ref, o_ref):
    """Single-block fused forward.

    x_ref   (T, N1)   packed, bias/indicator-augmented layer-1 LHS
    pos_ref (T, 1)    per-row positions (0 on context rows)
    msk_ref (T, 1)    1.0 on sequence rows, 0.0 on context rows
    w1_ref  (N1, H1)  block-structured layer-1 weights (+ b1 rows, indicators)
    w2_ref  (H1, nh)  stacked layer-2 weights (+ b2 rows via indicators)
    pe_ref  (2, nh)   row 0 = freq, row 1 = phase
    o_ref   (T, nh)   flattened (B, sumS+1, nh) output
    """
    # Layer 1 for every token of every branch (+ context) in ONE GEMM; the
    # per-branch one-hot indicator columns of X fold each branch's bias into
    # the dot and carry a relu-surviving 1.0 into the pass-through columns.
    h = jnp.maximum(
        jnp.dot(x_ref[...], w1_ref[...], preferred_element_type=jnp.float32),
        0.0)                                                     # (T, H1)

    # Layer 2 for all branches in ONE GEMM: block-structured h x stacked W2,
    # with the pass-through indicator rows of W2 supplying the per-branch b2.
    y = jnp.dot(h, w2_ref[...], preferred_element_type=jnp.float32)  # (T, nh)

    # Positional encoding: one transcendental per element; masked to zero on
    # the context rows.
    freq = pe_ref[0:1, :]                                        # (1, nh)
    phase = pe_ref[1:2, :]                                       # (1, nh)
    pe = jnp.sin(pos_ref[...] * freq + phase) * msk_ref[...]     # (T, nh)

    o_ref[...] = (y + pe).astype(o_ref.dtype)


# -------------------------------------------------------------------- wrapper

def _forward_impl(xTup, pTup, xc, params):
    f32 = jnp.float32
    nh = NH
    K = len(xTup)
    B, nxc = xc.shape
    sTup = tuple(int(x.shape[1]) for x in xTup)
    nTup = tuple(int(x.shape[2]) for x in xTup)
    sumS = sum(sTup)
    T = B * (sumS + 1)

    branch_params = list(params["lnLst"]) + [params["lnXc"]]
    feat_dims = list(nTup) + [nxc]

    # Column layout for the packed layer-1 LHS.
    col_offs, c = [], 0
    for n in feat_dims:
        col_offs.append(c)
        c += n
    ind_col0 = c                     # K+1 one-hot indicator columns
    N1 = c + (K + 1)
    H1 = (K + 1) * nh + (K + 1)      # per-branch hidden blocks + pass-through cols

    # ---- pack the LHS / positions / pe-mask (pure layout plumbing; fused by
    #      XLA under jit).  Rows are batch-major, branches concatenated along
    #      the token axis, context last -> rows already match the output.
    xblks, pblks, mblks = [], [], []
    for k in range(K):
        Sk, nk = sTup[k], nTup[k]
        xk = xTup[k].astype(f32)
        onehot = jnp.zeros((B, Sk, K + 1), f32).at[:, :, k].set(1.0)
        blk = jnp.concatenate(
            [jnp.zeros((B, Sk, col_offs[k]), f32), xk,
             jnp.zeros((B, Sk, ind_col0 - col_offs[k] - nk), f32), onehot],
            axis=-1)
        xblks.append(blk)
        pblks.append(pTup[k].astype(f32))
        mblks.append(jnp.ones((B, Sk), f32))
    # context branch: one token per batch element, no positional encoding
    onehot_c = jnp.zeros((B, 1, K + 1), f32).at[:, :, K].set(1.0)
    blk_c = jnp.concatenate(
        [jnp.zeros((B, 1, col_offs[K]), f32), xc.astype(f32)[:, None, :],
         jnp.zeros((B, 1, ind_col0 - col_offs[K] - nxc), f32), onehot_c],
        axis=-1)
    xblks.append(blk_c)
    pblks.append(jnp.zeros((B, 1), f32))
    mblks.append(jnp.zeros((B, 1), f32))

    X = jnp.concatenate(xblks, axis=1).reshape(T, N1)
    pos = jnp.concatenate(pblks, axis=1).reshape(T, 1)
    msk = jnp.concatenate(mblks, axis=1).reshape(T, 1)

    # ---- block-structured weights
    W1 = jnp.zeros((N1, H1), f32)
    W2 = jnp.zeros((H1, nh), f32)
    for k, (w1, b1, w2, b2) in enumerate(branch_params):
        W1 = W1.at[col_offs[k]:col_offs[k] + feat_dims[k],
                   k * nh:(k + 1) * nh].set(w1.astype(f32))
        W1 = W1.at[ind_col0 + k, k * nh:(k + 1) * nh].set(
            b1.reshape(nh).astype(f32))
        W1 = W1.at[ind_col0 + k, (K + 1) * nh + k].set(1.0)       # pass-through
        W2 = W2.at[k * nh:(k + 1) * nh, :].set(w2.astype(f32))
        W2 = W2.at[(K + 1) * nh + k, :].set(b2.reshape(nh).astype(f32))

    # ---- hoisted positional-encoding constants: pe[:, j] = sin(pos*freq + phase)
    j = np.arange(nh)
    pe_tab = jnp.asarray(np.stack([np.pi / (j // 2 + 1),
                                   (j % 2) * (np.pi / 2.0)]).astype(np.float32))

    vmem = pl.BlockSpec(memory_space=pltpu.MemorySpace.VMEM)
    out = pl.pallas_call(
        _fused_kernel,
        out_shape=jax.ShapeDtypeStruct((T, nh), f32),
        in_specs=[vmem] * 6,
        out_specs=vmem,
    )(X, pos, msk, W1, W2, pe_tab)
    return out.reshape(B, sumS + 1, nh)


input_feature_forward = jax.jit(_forward_impl)


# ------------------------------------------------------------------ reference

def _ref_forward(xTup, pTup, xc, params):
    def mlp(x, p):
        w1, b1, w2, b2 = p
        return jnp.maximum(x @ w1 + b1, 0.0) @ w2 + b2

    def get_pos(pos, nh):
        i = jnp.arange(nh // 2, dtype=jnp.float32)
        ang = pos[..., None] * jnp.pi / (i + 1.0)                 # (B, S, nh/2)
        pe = jnp.stack([jnp.sin(ang), jnp.cos(ang)], axis=-1)     # (B, S, nh/2, 2)
        return pe.reshape(pos.shape + (nh,))

    outs = [
        mlp(xTup[k], params["lnLst"][k]) + get_pos(pTup[k].astype(jnp.float32), NH)
        for k in range(len(xTup))
    ]
    outC = mlp(xc, params["lnXc"])
    return jnp.concatenate(outs + [outC[:, None, :]], axis=1)


# --------------------------------------------------------------------- params

def _init_mlp_params(key, n_in, nh):
    k1, k2, k3, k4 = jax.random.split(key, 4)
    scale1 = 1.0 / jnp.sqrt(jnp.float32(n_in))
    scale2 = 1.0 / jnp.sqrt(jnp.float32(nh))
    w1 = jax.random.uniform(k1, (n_in, nh), jnp.float32, -scale1, scale1)
    b1 = jax.random.uniform(k2, (1, nh), jnp.float32, -scale1, scale1)
    w2 = jax.random.uniform(k3, (nh, nh), jnp.float32, -scale2, scale2)
    b2 = jax.random.uniform(k4, (1, nh), jnp.float32, -scale2, scale2)
    return (w1, b1, w2, b2)


# ----------------------------------------------------------------------- main

if __name__ == "__main__":
    key = jax.random.PRNGKey(0)

    B = 2
    nTup = (6, 5)        # feature dims of the sequence branches
    sTup = (8, 8)        # sequence lengths
    nxc = 4              # context feature dim
    nh = NH

    keys = jax.random.split(key, 8)

    params = {
        "lnLst": [_init_mlp_params(keys[i], nTup[i], nh) for i in range(len(nTup))],
        "lnXc": _init_mlp_params(keys[4], nxc, nh),
    }

    xTup = [
        jax.random.normal(keys[5 + k], (B, sTup[k], nTup[k]), jnp.float32)
        for k in range(len(nTup))
    ]
    # positions (arbitrary real-valued, like day-of-year fractions)
    pTup = [
        jax.random.uniform(jax.random.fold_in(keys[7], k), (B, sTup[k]),
                           jnp.float32, 0.0, 10.0)
        for k in range(len(nTup))
    ]
    xc = jax.random.normal(jax.random.fold_in(keys[7], 99), (B, nxc), jnp.float32)

    out = jax.block_until_ready(input_feature_forward(xTup, pTup, xc, params))
    ref = jax.block_until_ready(_ref_forward(xTup, pTup, xc, params))

    assert out.shape == (B, sum(sTup) + 1, nh), out.shape
    max_err = float(jnp.abs(out - ref).max())
    # small slack vs 1e-5: single-sin cos(x)=sin(x+pi/2), prefolded freq table,
    # and bias folded into the dot accumulate in a different order than the
    # reference at |angle| ~ 10*pi.
    assert jnp.allclose(out, ref, atol=1e-4, rtol=1e-4), max_err

    print("KERNEL_OK")
</pallas_src>

<mosaic_0001>
module attributes {stable_mosaic.version = 11 : i64} {
  func.func @_fused_kernel(%arg0: memref<34x18xf32, #tpu.memory_space<vmem>>, %arg1: memref<34x1xf32, #tpu.memory_space<vmem>>, %arg2: memref<34x1xf32, #tpu.memory_space<vmem>>, %arg3: memref<18x99xf32, #tpu.memory_space<vmem>>, %arg4: memref<99x32xf32, #tpu.memory_space<vmem>>, %arg5: memref<2x32xf32, #tpu.memory_space<vmem>>, %arg6: memref<34x32xf32, #tpu.memory_space<vmem>>) attributes {dimension_semantics = [], scalar_prefetch = 0 : i64, scratch_operands = 0 : i64, tpu.core_type = #tpu.core_type<tc>} {
    %c0 = arith.constant 0 : index
    %c0_0 = arith.constant 0 : index
    %0 = vector.load %arg0[%c0, %c0_0] : memref<34x18xf32, #tpu.memory_space<vmem>>, vector<34x18xf32>
    %c0_1 = arith.constant 0 : index
    %c0_2 = arith.constant 0 : index
    %1 = vector.load %arg3[%c0_1, %c0_2] : memref<18x99xf32, #tpu.memory_space<vmem>>, vector<18x99xf32>
    %cst = arith.constant dense<0.000000e+00> : vector<34x99xf32>
    %2 = tpu.matmul %0, %1, %cst {dimension_numbers = #tpu.dot_dimension_numbers<[1], [0], [0], [1], [0, 0, 1, 1], [], []>} : vector<34x18xf32>, vector<18x99xf32>, vector<34x99xf32> -> vector<34x99xf32>
    %cst_3 = arith.constant 0.000000e+00 : f32
    %3 = vector.broadcast %cst_3 : f32 to vector<34x99xf32>
    %4 = arith.maximumf %2, %3 : vector<34x99xf32>
    %c0_4 = arith.constant 0 : index
    %c0_5 = arith.constant 0 : index
    %5 = vector.load %arg4[%c0_4, %c0_5] : memref<99x32xf32, #tpu.memory_space<vmem>>, vector<99x32xf32>
    %cst_6 = arith.constant dense<0.000000e+00> : vector<34x32xf32>
    %6 = tpu.matmul %4, %5, %cst_6 {dimension_numbers = #tpu.dot_dimension_numbers<[1], [0], [0], [1], [0, 0, 1, 1], [], []>} : vector<34x99xf32>, vector<99x32xf32>, vector<34x32xf32> -> vector<34x32xf32>
    %c0_7 = arith.constant 0 : index
    %c0_8 = arith.constant 0 : index
    %7 = vector.load %arg5[%c0_7, %c0_8] : memref<2x32xf32, #tpu.memory_space<vmem>>, vector<1x32xf32>
    %c1 = arith.constant 1 : index
    %c0_9 = arith.constant 0 : index
    %8 = vector.load %arg5[%c1, %c0_9] : memref<2x32xf32, #tpu.memory_space<vmem>>, vector<1x32xf32>
    %c0_10 = arith.constant 0 : index
    %c0_11 = arith.constant 0 : index
    %9 = vector.load %arg1[%c0_10, %c0_11] : memref<34x1xf32, #tpu.memory_space<vmem>>, vector<34x1xf32>
    %10 = vector.broadcast %9 : vector<34x1xf32> to vector<34x32xf32>
    %11 = vector.broadcast %7 : vector<1x32xf32> to vector<34x32xf32>
    %12 = arith.mulf %10, %11 : vector<34x32xf32>
    %13 = vector.broadcast %8 : vector<1x32xf32> to vector<34x32xf32>
    %14 = arith.addf %12, %13 : vector<34x32xf32>
    %15 = math.sin %14 : vector<34x32xf32>
    %c0_12 = arith.constant 0 : index
    %c0_13 = arith.constant 0 : index
    %16 = vector.load %arg2[%c0_12, %c0_13] : memref<34x1xf32, #tpu.memory_space<vmem>>, vector<34x1xf32>
    %17 = vector.broadcast %16 : vector<34x1xf32> to vector<34x32xf32>
    %18 = arith.mulf %15, %17 : vector<34x32xf32>
    %19 = arith.addf %6, %18 : vector<34x32xf32>
    %c0_14 = arith.constant 0 : index
    %c0_15 = arith.constant 0 : index
    %20 = vector.load %arg6[%c0_14, %c0_15] : memref<34x32xf32, #tpu.memory_space<vmem>>, vector<34x32xf32>
    tpu.vector_store %arg6[%c0_14, %c0_15], %19 {strides = array<i32>} : memref<34x32xf32, #tpu.memory_space<vmem>>, vector<34x32xf32>,
    return
  }
}

</mosaic_0001>

<llo_original>
// kernel: _forward_impl.1
$region0: #{_forward_impl.1}
  #allocation0 [shape = 'u32[]', space=smem, size = 0x4, offset = 0x4, fixed_abs, tag = 'smem constant byte address 0x4 - core index']
  #allocation1 [shape = 'u32[72,128]{1,0:T(1,128)}', space=vmem, size = 0x9000, scoped, tag = 'internal scratch']
  %s0 = inlined_call_operand.vmem [shape: f32[34,18], index: 0, kind: input, shape index: {}]
  %s1 = inlined_call_operand.vmem [shape: f32[34,1], index: 1, kind: input, shape index: {}]
  %s2 = inlined_call_operand.vmem [shape: f32[34,1], index: 2, kind: input, shape index: {}]
  %s3 = inlined_call_operand.vmem [shape: f32[18,99], index: 3, kind: input, shape index: {}]
  %s4 = inlined_call_operand.vmem [shape: f32[99,32], index: 4, kind: input, shape index: {}]
  %s5 = inlined_call_operand.vmem [shape: f32[2,32], index: 5, kind: input, shape index: {}]
  %s6 = inlined_call_operand.vmem [shape: f32[34,32], index: 6, kind: output, shape index: {}]
  %s7 = sld [smem:[#allocation0]]
  $region34: #{_forward_impl.1} parent=0
    _
  %s9 = ssub.s32 1, %s7
  %s10 = scalar_select 0, %s9, %s7
  // Predicated region
  $region2: #{_forward_impl.1} parent=0 // pred_check
    _
  $region3: #{_forward_impl.1} parent=0 // pred_check_branch
    %12 = sbr.rel (0) target = $region5
  $region4: #{_forward_impl.1} parent=0 // pred_region
    _
  $region5: #{_forward_impl.1} parent=0 // pred_fallthru
    _
  // Predicated region
  $region6: #{_forward_impl.1} parent=0 // pred_check
    _
  $region7: #{_forward_impl.1} parent=0 // pred_check_branch
    %14 = sbr.rel (0) target = $region9
  $region8: #{_forward_impl.1} parent=0 // pred_region
    _
  $region9: #{_forward_impl.1} parent=0 // pred_fallthru
    _
  // Predicated region
  $region10: #{_forward_impl.1} parent=0 // pred_check
    _
  $region11: #{_forward_impl.1} parent=0 // pred_check_branch
    %16 = sbr.rel (0) target = $region13
  $region12: #{_forward_impl.1} parent=0 // pred_region
    _
  $region13: #{_forward_impl.1} parent=0 // pred_fallthru
    _
  // Predicated region
  $region14: #{_forward_impl.1} parent=0 // pred_check
    _
  $region15: #{_forward_impl.1} parent=0 // pred_check_branch
    %18 = sbr.rel (0) target = $region17
  $region16: #{_forward_impl.1} parent=0 // pred_region
    _
  $region17: #{_forward_impl.1} parent=0 // pred_fallthru
    _
  // Predicated region
  $region18: #{_forward_impl.1} parent=0 // pred_check
    _
  $region19: #{_forward_impl.1} parent=0 // pred_check_branch
    %20 = sbr.rel (0) target = $region21
  $region20: #{_forward_impl.1} parent=0 // pred_region
    _
  $region21: #{_forward_impl.1} parent=0 // pred_fallthru
    _
  // Predicated region
  $region22: #{_forward_impl.1} parent=0 // pred_check
    _
  $region23: #{_forward_impl.1} parent=0 // pred_check_branch
    %22 = sbr.rel (0) target = $region25
  $region24: #{_forward_impl.1} parent=0 // pred_region
    _
  $region25: #{_forward_impl.1} parent=0 // pred_fallthru
    _
  %v23 = vld [vmem:[%s0] sm:$0xff]
  %v24 = vld [vmem:[%s0 + $0x8] sm:$0xff]
  %v25 = vld [vmem:[%s0 + $0x10] sm:$0xff]
  %v26 = vld [vmem:[%s0 + $0x18] sm:$0xff]
  %v27 = vld [vmem:[%s0 + $0x20] sm:$0x3]
  %v28 = vld [vmem:[%s3] sm:$0xff]
  %v29 = vld [vmem:[%s3 + $0x8] sm:$0xff]
  %v30 = vld [vmem:[%s3 + $0x10] sm:$0x3]
  %vm31 = vcmask 146432
  %v33 = vsel %vm31, %v23, 0
  %v36 = vsel %vm31, %v24, 0
  %v39 = vsel %vm31, %v25, 0
  %v42 = vsel %vm31, %v26, 0
  %v45 = vsel %vm31, %v27, 0
  %vm47 = vcmask 1041408
  %v49 = vsel %vm47, %v30, 0
  %51 = vmatpush.msra.mxu0 0.0
  %52 = vmatpush.msra.mxu0 0.0
  %53 = vmatpush.msra.mxu0 0.0
  %54 = vmatpush.msra.mxu0 0.0
  %55 = vmatpush.msra.mxu0 0.0
  %56 = vmatpush.msra.mxu0 0.0
  %57 = vmatpush.msra.mxu0 0.0
  %58 = vmatpush.msra.mxu0 0.0
  %59 = vmatpush.msra.mxu0 0.0
  %60 = vmatpush.msra.mxu0 0.0
  %61 = vmatpush.msra.mxu0 0.0
  %62 = vmatpush.msra.mxu0 0.0
  %63 = vmatpush.msra.mxu0 0.0
  %64 = vmatpush.msra.mxu0 %v49
  %65 = vmatpush.msra.mxu0 %v29
  %66 = vmatpush.msra.mxu0 %v28
  %67 = vmatmul.f32.gmra.mxu0 %v33
  %v68 = vpop.f32.mrf.mxu0
  %v69 = vadd.f32 0.0, %v68
  %70 = vmatmul.f32.gmra.mxu0 %v36
  %v71 = vpop.f32.mrf.mxu0
  %v72 = vadd.f32 0.0, %v71
  %73 = vmatmul.f32.gmra.mxu0 %v39
  %v74 = vpop.f32.mrf.mxu0
  %v75 = vadd.f32 0.0, %v74
  %76 = vmatmul.f32.gmra.mxu0 %v42
  %v77 = vpop.f32.mrf.mxu0
  %v78 = vadd.f32 0.0, %v77
  %79 = vmatmul.f32.gmra.mxu0 %v45
  %v80 = vpop.f32.mrf.mxu0
  %v81 = vadd.f32 0.0, %v80
  %82 = vdwg.mxu0
  %v83 = vmax.f32 %v69, 0.0
  %v84 = vmax.f32 %v72, 0.0
  %v85 = vmax.f32 %v75, 0.0
  %v86 = vmax.f32 %v78, 0.0
  %v87 = vmax.f32 %v81, 0.0
  %v88 = vld [vmem:[%s4] sm:$0xff]
  %v89 = vld [vmem:[%s4 + $0x8] sm:$0xff]
  %v90 = vld [vmem:[%s4 + $0x10] sm:$0xff]
  %v91 = vld [vmem:[%s4 + $0x18] sm:$0xff]
  %v92 = vld [vmem:[%s4 + $0x20] sm:$0xff]
  %v93 = vld [vmem:[%s4 + $0x28] sm:$0xff]
  %v94 = vld [vmem:[%s4 + $0x30] sm:$0xff]
  %v95 = vld [vmem:[%s4 + $0x38] sm:$0xff]
  %v96 = vld [vmem:[%s4 + $0x40] sm:$0xff]
  %v97 = vld [vmem:[%s4 + $0x48] sm:$0xff]
  %v98 = vld [vmem:[%s4 + $0x50] sm:$0xff]
  %v99 = vld [vmem:[%s4 + $0x58] sm:$0xff]
  %v100 = vld [vmem:[%s4 + $0x60] sm:$0x7]
  %v101 = vld [vmem:[%s5] sm:$0x1]
  %v102 = vld [vmem:[%s5 + $0x1] sm:$0x1]
  %v103 = vld [vmem:[%s1] sm:$0xff]
  %v104 = vld [vmem:[%s1 + $0x8] sm:$0xff]
  %v105 = vld [vmem:[%s1 + $0x10] sm:$0xff]
  %v106 = vld [vmem:[%s1 + $0x18] sm:$0xff]
  %v107 = vld [vmem:[%s1 + $0x20] sm:$0x3]
  %109 = vset.pattern.permute.xlu0 0
  %110 = vperm.xlu0 %109, %v103
  %v111 = vpop.permute.xlu0 %110
  %114 = vset.pattern.permute.xlu0 0
  %115 = vperm.xlu0 %114, %v104
  %v116 = vpop.permute.xlu0 %115
  %119 = vset.pattern.permute.xlu0 0
  %120 = vperm.xlu0 %119, %v105
  %v121 = vpop.permute.xlu0 %120
  %124 = vset.pattern.permute.xlu0 0
  %125 = vperm.xlu0 %124, %v106
  %v126 = vpop.permute.xlu0 %125
  %129 = vset.pattern.permute.xlu0 0
  %130 = vperm.xlu0 %129, %v107
  %v131 = vpop.permute.xlu0 %130
  %v133 = vperm.slane %v101, 0
  %v134 = vmul.f32 %v111, %v133
  %v135 = vmul.f32 %v116, %v133
  %v136 = vmul.f32 %v121, %v133
  %v137 = vmul.f32 %v126, %v133
  %v138 = vmul.f32 %v131, %v133
  %v139 = vperm.slane %v102, 0
  %v140 = vadd.f32 %v134, %v139
  %v141 = vadd.f32 %v135, %v139
  %v142 = vadd.f32 %v136, %v139
  %v143 = vadd.f32 %v137, %v139
  %v144 = vadd.f32 %v138, %v139
  %v145 = vand.u32 2147483647, %v140
  %vm146 = vcmp.le.f32.partialorder %v145, 0.7853982
  %vm147 = vcmp.lt.s32.totalorder %v140, 0
  %v148 = vand.u32 %v140, 2139095040
  %v149 = vshrl.u32 %v148, 23
  %v150 = vsub.s32 %v149, 127
  %v151 = vand.u32 2147483647, %v140
  %v152 = vand.u32 %v151, 8388607
  %v153 = vor.u32 %v152, 8388608
  %v154 = vsub.s32 0, %v153
  %v155 = vadd.s32 %v150, 1
  %vm156 = vcmp.gt.s32.totalorder %v155, 0
  %v157 = vsel %vm156, %v155, 0
  %v158 = vshrl.u32 %v157, 5
  %v159 = vand.u32 %v157, 31
  %v160 = vsub.s32 32, %v159
  %v161 = vshrl.u32 683565275, %v160
  %v162 = vshll.u32 683565275, %v159
  %v163 = vshrl.u32 2475754826, %v160
  %v164 = vor.u32 %v162, %v163
  %v165 = vshll.u32 2475754826, %v159
  %v166 = vshrl.u32 2131351028, %v160
  %v167 = vor.u32 %v165, %v166
  %v168 = vshll.u32 2131351028, %v159
  %v169 = vshrl.u32 2102212464, %v160
  %v170 = vor.u32 %v168, %v169
  %v171 = vshll.u32 2102212464, %v159
  %v172 = vshrl.u32 920167782, %v160
  %v173 = vor.u32 %v171, %v172
  %v174 = vshll.u32 920167782, %v159
  %v175 = vshrl.u32 1326507024, %v160
  %v176 = vor.u32 %v174, %v175
  %vm177 = vcmp.lt.s32.totalorder %v158, 1
  %vm178 = vcmp.lt.s32.totalorder %v158, 2
  %vm179 = vcmp.lt.s32.totalorder %v158, 3
  %vm180 = vcmp.lt.s32.totalorder %v158, 4
  %v181 = vsel %vm177, %v161, %v164
  %v182 = vsel %vm180, %v170, 2102212464
  %v183 = vsel %vm179, %v167, %v182
  %v184 = vsel %vm178, %v181, %v183
  %v185 = vsel %vm177, %v164, %v167
  %v186 = vsel %vm180, %v173, 920167782
  %v187 = vsel %vm179, %v170, %v186
  %v188 = vsel %vm178, %v185, %v187
  %v189 = vsel %vm177, %v167, %v170
  %v190 = vsel %vm180, %v176, 1326507024
  %v191 = vsel %vm179, %v173, %v190
  %v192 = vsel %vm178, %v189, %v191
  %v193 = vshll.u32 %v153, 8
  %v194 = vand.u32 %v193, 65535
  %v195 = vshrl.u32 %v193, 16
  %v196 = vand.u32 %v192, 65535
  %v197 = vshrl.u32 %v192, 16
  %v198 = vmul.u32 %v194, %v196
  %v199 = vmul.u32 %v194, %v197
  %v200 = vmul.u32 %v195, %v196
  %v201 = vmul.u32 %v195, %v197
  %v202 = vshll.u32 %v199, 16
  %v203 = vshrl.u32 %v199, 16
  %v204 = vshll.u32 %v200, 16
  %v205 = vshrl.u32 %v200, 16
  %vm206 = vc.u32 %v198, %v202
  %v207 = vsel %vm206, 1, 0
  %v208 = vadd.s32 %v198, %v202
  %v209 = vadd.s32 %v201, %v207
  %vm210 = vc.u32 %v208, %v204
  %v211 = vsel %vm210, 1, 0
  %v212 = vadd.s32 %v208, %v204
  %v213 = vadd.s32 %v209, %v211
  %v214 = vadd.s32 %v213, %v203
  %v215 = vadd.s32 %v214, %v205
  %v216 = vand.u32 %v193, 65535
  %v217 = vshrl.u32 %v193, 16
  %v218 = vand.u32 %v188, 65535
  %v219 = vshrl.u32 %v188, 16
  %v220 = vmul.u32 %v216, %v218
  %v221 = vmul.u32 %v216, %v219
  %v222 = vmul.u32 %v217, %v218
  %v223 = vmul.u32 %v217, %v219
  %v224 = vshll.u32 %v221, 16
  %v225 = vshrl.u32 %v221, 16
  %v226 = vshll.u32 %v222, 16
  %v227 = vshrl.u32 %v222, 16
  %vm228 = vc.u32 %v220, %v224
  %v229 = vsel %vm228, 1, 0
  %v230 = vadd.s32 %v220, %v224
  %v231 = vadd.s32 %v223, %v229
  %vm232 = vc.u32 %v230, %v226
  %v233 = vsel %vm232, 1, 0
  %v234 = vadd.s32 %v230, %v226
  %v235 = vadd.s32 %v231, %v233
  %v236 = vadd.s32 %v235, %v225
  %v237 = vadd.s32 %v236, %v227
  %v238 = vmul.u32 %v193, %v184
  %v239 = vadd.s32 %v215, %v234
  %vm240 = vc.u32 %v215, %v234
  %v241 = vadd.s32 %v237, 1
  %v242 = vsel %vm240, %v241, %v237
  %v243 = vadd.s32 %v238, %v242
  %v244 = vadd.s32 %v243, 536870912
  %v245 = vshrl.u32 %v244, 30
  %v246 = vshll.u32 %v245, 30
  %v247 = vsub.s32 %v243, %v246
  %vm248 = vcmp.lt.s32.totalorder %v247, 0
  %v249 = vsub.s32 0, %v247
  %v250 = vsel %vm248, %v249, %v247
  %v251 = vclz %v250
  %v252 = vsub.s32 %v251, 2
  %vm253 = vcmp.gt.s32.totalorder 0, %v252
  %v254 = vsel %vm253, 0, %v252
  %v255 = vsub.s32 32, %v254
  %v256 = vshll.u32 %v247, %v254
  %v257 = vshrl.u32 %v239, %v255
  %v258 = vor.u32 %v256, %v257
  %v259 = vsub.s32 4294967266, %v254
  %v260 = vadd.s32 %v259, 127
  %v261 = vshll.u32 %v260, 23
  %v262 = vor.u32 4788187, %v261
  %v263 = vand.u32 2147483647, %v262
  %v265 = vcvt.s32.f32 %v258
  %v266 = vmul.f32 %v265, %v263
  %v267 = vxor.u32 %v266, 2147483648
  %v268 = vsel %vm147, %v267, %v266
  %v269 = vsub.s32 4, %v245
  %v270 = vsel %vm147, %v269, %v245
  %v271 = vsel %vm146, %v140, %v268
  %v272 = vsel %vm146, 0, %v270
  %v273 = vmul.f32 %v271, %v271
  %v274 = vmul.f32 %v273, -0.001358992
  %v275 = vadd.f32 %v274, 0.041655596
  %v276 = vmul.f32 %v273, %v275
  %v277 = vadd.f32 %v276, -0.4999988
  %v278 = vmul.f32 %v273, %v277
  %v279 = vadd.f32 1.0, %v278
  %v280 = vmul.f32 %v271, %v271
  %v281 = vmul.f32 %v280, -0.00019511016
  %v282 = vadd.f32 %v281, 0.008332121
  %v283 = vmul.f32 %v280, %v282
  %v284 = vadd.f32 %v283, -0.16666654
  %v285 = vmul.f32 %v280, %v284
  %v286 = vadd.f32 %v285, 1.0
  %v287 = vmul.f32 %v286, %v271
  %vm288 = vweird.f32 %v140
  %v289 = vadd.s32 %v272, 3
  %v290 = vand.u32 %v289, 3
  %vm291 = vcmp.lt.s32.totalorder %v290, 2
  %vm292 = vcmp.eq.s32.totalorder %v290, 0
  %v293 = vxor.u32 %v287, 2147483648
  %v294 = vsel %vm292, %v279, %v293
  %vm295 = vcmp.eq.s32.totalorder %v290, 2
  %v296 = vxor.u32 %v279, 2147483648
  %v297 = vsel %vm295, %v296, %v287
  %v298 = vsel %vm291, %v294, %v297
  %v299 = vsel %vm288, nan, %v298
  %v300 = vand.u32 2147483647, %v141
  %vm301 = vcmp.le.f32.partialorder %v300, 0.7853982
  %vm302 = vcmp.lt.s32.totalorder %v141, 0
  %v303 = vand.u32 %v141, 2139095040
  %v304 = vshrl.u32 %v303, 23
  %v305 = vsub.s32 %v304, 127
  %v306 = vand.u32 2147483647, %v141
  %v307 = vand.u32 %v306, 8388607
  %v308 = vor.u32 %v307, 8388608
  %v309 = vsub.s32 0, %v308
  %v310 = vadd.s32 %v305, 1
  %vm311 = vcmp.gt.s32.totalorder %v310, 0
  %v312 = vsel %vm311, %v310, 0
  %v313 = vshrl.u32 %v312, 5
  %v314 = vand.u32 %v312, 31
  %v315 = vsub.s32 32, %v314
  %v316 = vshrl.u32 683565275, %v315
  %v317 = vshll.u32 683565275, %v314
  %v318 = vshrl.u32 2475754826, %v315
  %v319 = vor.u32 %v317, %v318
  %v320 = vshll.u32 2475754826, %v314
  %v321 = vshrl.u32 2131351028, %v315
  %v322 = vor.u32 %v320, %v321
  %v323 = vshll.u32 2131351028, %v314
  %v324 = vshrl.u32 2102212464, %v315
  %v325 = vor.u32 %v323, %v324
  %v326 = vshll.u32 2102212464, %v314
  %v327 = vshrl.u32 920167782, %v315
  %v328 = vor.u32 %v326, %v327
  %v329 = vshll.u32 920167782, %v314
  %v330 = vshrl.u32 1326507024, %v315
  %v331 = vor.u32 %v329, %v330
  %vm332 = vcmp.lt.s32.totalorder %v313, 1
  %vm333 = vcmp.lt.s32.totalorder %v313, 2
  %vm334 = vcmp.lt.s32.totalorder %v313, 3
  %vm335 = vcmp.lt.s32.totalorder %v313, 4
  %v336 = vsel %vm332, %v316, %v319
  %v337 = vsel %vm335, %v325, 2102212464
  %v338 = vsel %vm334, %v322, %v337
  %v339 = vsel %vm333, %v336, %v338
  %v340 = vsel %vm332, %v319, %v322
  %v341 = vsel %vm335, %v328, 920167782
  %v342 = vsel %vm334, %v325, %v341
  %v343 = vsel %vm333, %v340, %v342
  %v344 = vsel %vm332, %v322, %v325
  %v345 = vsel %vm335, %v331, 1326507024
  %v346 = vsel %vm334, %v328, %v345
  %v347 = vsel %vm333, %v344, %v346
  %v348 = vshll.u32 %v308, 8
  %v349 = vand.u32 %v348, 65535
  %v350 = vshrl.u32 %v348, 16
  %v351 = vand.u32 %v347, 65535
  %v352 = vshrl.u32 %v347, 16
  %v353 = vmul.u32 %v349, %v351
  %v354 = vmul.u32 %v349, %v352
  %v355 = vmul.u32 %v350, %v351
  %v356 = vmul.u32 %v350, %v352
  %v357 = vshll.u32 %v354, 16
  %v358 = vshrl.u32 %v354, 16
  %v359 = vshll.u32 %v355, 16
  %v360 = vshrl.u32 %v355, 16
  %vm361 = vc.u32 %v353, %v357
  %v362 = vsel %vm361, 1, 0
  %v363 = vadd.s32 %v353, %v357
  %v364 = vadd.s32 %v356, %v362
  %vm365 = vc.u32 %v363, %v359
  %v366 = vsel %vm365, 1, 0
  %v367 = vadd.s32 %v363, %v359
  %v368 = vadd.s32 %v364, %v366
  %v369 = vadd.s32 %v368, %v358
  %v370 = vadd.s32 %v369, %v360
  %v371 = vand.u32 %v348, 65535
  %v372 = vshrl.u32 %v348, 16
  %v373 = vand.u32 %v343, 65535
  %v374 = vshrl.u32 %v343, 16
  %v375 = vmul.u32 %v371, %v373
  %v376 = vmul.u32 %v371, %v374
  %v377 = vmul.u32 %v372, %v373
  %v378 = vmul.u32 %v372, %v374
  %v379 = vshll.u32 %v376, 16
  %v380 = vshrl.u32 %v376, 16
  %v381 = vshll.u32 %v377, 16
  %v382 = vshrl.u32 %v377, 16
  %vm383 = vc.u32 %v375, %v379
  %v384 = vsel %vm383, 1, 0
  %v385 = vadd.s32 %v375, %v379
  %v386 = vadd.s32 %v378, %v384
  %vm387 = vc.u32 %v385, %v381
  %v388 = vsel %vm387, 1, 0
  %v389 = vadd.s32 %v385, %v381
  %v390 = vadd.s32 %v386, %v388
  %v391 = vadd.s32 %v390, %v380
  %v392 = vadd.s32 %v391, %v382
  %v393 = vmul.u32 %v348, %v339
  %v394 = vadd.s32 %v370, %v389
  %vm395 = vc.u32 %v370, %v389
  %v396 = vadd.s32 %v392, 1
  %v397 = vsel %vm395, %v396, %v392
  %v398 = vadd.s32 %v393, %v397
  %v399 = vadd.s32 %v398, 536870912
  %v400 = vshrl.u32 %v399, 30
  %v401 = vshll.u32 %v400, 30
  %v402 = vsub.s32 %v398, %v401
  %vm403 = vcmp.lt.s32.totalorder %v402, 0
  %v404 = vsub.s32 0, %v402
  %v405 = vsel %vm403, %v404, %v402
  %v406 = vclz %v405
  %v407 = vsub.s32 %v406, 2
  %vm408 = vcmp.gt.s32.totalorder 0, %v407
  %v409 = vsel %vm408, 0, %v407
  %v410 = vsub.s32 32, %v409
  %v411 = vshll.u32 %v402, %v409
  %v412 = vshrl.u32 %v394, %v410
  %v413 = vor.u32 %v411, %v412
  %v414 = vsub.s32 4294967266, %v409
  %v415 = vadd.s32 %v414, 127
  %v416 = vshll.u32 %v415, 23
  %v417 = vor.u32 4788187, %v416
  %v418 = vand.u32 2147483647, %v417
  %v420 = vcvt.s32.f32 %v413
  %v421 = vmul.f32 %v420, %v418
  %v422 = vxor.u32 %v421, 2147483648
  %v423 = vsel %vm302, %v422, %v421
  %v424 = vsub.s32 4, %v400
  %v425 = vsel %vm302, %v424, %v400
  %v426 = vsel %vm301, %v141, %v423
  %v427 = vsel %vm301, 0, %v425
  %v428 = vmul.f32 %v426, %v426
  %v429 = vmul.f32 %v428, -0.001358992
  %v430 = vadd.f32 %v429, 0.041655596
  %v431 = vmul.f32 %v428, %v430
  %v432 = vadd.f32 %v431, -0.4999988
  %v433 = vmul.f32 %v428, %v432
  %v434 = vadd.f32 1.0, %v433
  %v435 = vmul.f32 %v426, %v426
  %v436 = vmul.f32 %v435, -0.00019511016
  %v437 = vadd.f32 %v436, 0.008332121
  %v438 = vmul.f32 %v435, %v437
  %v439 = vadd.f32 %v438, -0.16666654
  %v440 = vmul.f32 %v435, %v439
  %v441 = vadd.f32 %v440, 1.0
  %v442 = vmul.f32 %v441, %v426
  %vm443 = vweird.f32 %v141
  %v444 = vadd.s32 %v427, 3
  %v445 = vand.u32 %v444, 3
  %vm446 = vcmp.lt.s32.totalorder %v445, 2
  %vm447 = vcmp.eq.s32.totalorder %v445, 0
  %v448 = vxor.u32 %v442, 2147483648
  %v449 = vsel %vm447, %v434, %v448
  %vm450 = vcmp.eq.s32.totalorder %v445, 2
  %v451 = vxor.u32 %v434, 2147483648
  %v452 = vsel %vm450, %v451, %v442
  %v453 = vsel %vm446, %v449, %v452
  %v454 = vsel %vm443, nan, %v453
  %v455 = vand.u32 2147483647, %v142
  %vm456 = vcmp.le.f32.partialorder %v455, 0.7853982
  %vm457 = vcmp.lt.s32.totalorder %v142, 0
  %v458 = vand.u32 %v142, 2139095040
  %v459 = vshrl.u32 %v458, 23
  %v460 = vsub.s32 %v459, 127
  %v461 = vand.u32 2147483647, %v142
  %v462 = vand.u32 %v461, 8388607
  %v463 = vor.u32 %v462, 8388608
  %v464 = vsub.s32 0, %v463
  %v465 = vadd.s32 %v460, 1
  %vm466 = vcmp.gt.s32.totalorder %v465, 0
  %v467 = vsel %vm466, %v465, 0
  %v468 = vshrl.u32 %v467, 5
  %v469 = vand.u32 %v467, 31
  %v470 = vsub.s32 32, %v469
  %v471 = vshrl.u32 683565275, %v470
  %v472 = vshll.u32 683565275, %v469
  %v473 = vshrl.u32 2475754826, %v470
  %v474 = vor.u32 %v472, %v473
  %v475 = vshll.u32 2475754826, %v469
  %v476 = vshrl.u32 2131351028, %v470
  %v477 = vor.u32 %v475, %v476
  %v478 = vshll.u32 2131351028, %v469
  %v479 = vshrl.u32 2102212464, %v470
  %v480 = vor.u32 %v478, %v479
  %v481 = vshll.u32 2102212464, %v469
  %v482 = vshrl.u32 920167782, %v470
  %v483 = vor.u32 %v481, %v482
  %v484 = vshll.u32 920167782, %v469
  %v485 = vshrl.u32 1326507024, %v470
  %v486 = vor.u32 %v484, %v485
  %vm487 = vcmp.lt.s32.totalorder %v468, 1
  %vm488 = vcmp.lt.s32.totalorder %v468, 2
  %vm489 = vcmp.lt.s32.totalorder %v468, 3
  %vm490 = vcmp.lt.s32.totalorder %v468, 4
  %v491 = vsel %vm487, %v471, %v474
  %v492 = vsel %vm490, %v480, 2102212464
  %v493 = vsel %vm489, %v477, %v492
  %v494 = vsel %vm488, %v491, %v493
  %v495 = vsel %vm487, %v474, %v477
  %v496 = vsel %vm490, %v483, 920167782
  %v497 = vsel %vm489, %v480, %v496
  %v498 = vsel %vm488, %v495, %v497
  %v499 = vsel %vm487, %v477, %v480
  %v500 = vsel %vm490, %v486, 1326507024
  %v501 = vsel %vm489, %v483, %v500
  %v502 = vsel %vm488, %v499, %v501
  %v503 = vshll.u32 %v463, 8
  %v504 = vand.u32 %v503, 65535
  %v505 = vshrl.u32 %v503, 16
  %v506 = vand.u32 %v502, 65535
  %v507 = vshrl.u32 %v502, 16
  %v508 = vmul.u32 %v504, %v506
  %v509 = vmul.u32 %v504, %v507
  %v510 = vmul.u32 %v505, %v506
  %v511 = vmul.u32 %v505, %v507
  %v512 = vshll.u32 %v509, 16
  %v513 = vshrl.u32 %v509, 16
  %v514 = vshll.u32 %v510, 16
  %v515 = vshrl.u32 %v510, 16
  %vm516 = vc.u32 %v508, %v512
  %v517 = vsel %vm516, 1, 0
  %v518 = vadd.s32 %v508, %v512
  %v519 = vadd.s32 %v511, %v517
  %vm520 = vc.u32 %v518, %v514
  %v521 = vsel %vm520, 1, 0
  %v522 = vadd.s32 %v518, %v514
  %v523 = vadd.s32 %v519, %v521
  %v524 = vadd.s32 %v523, %v513
  %v525 = vadd.s32 %v524, %v515
  %v526 = vand.u32 %v503, 65535
  %v527 = vshrl.u32 %v503, 16
  %v528 = vand.u32 %v498, 65535
  %v529 = vshrl.u32 %v498, 16
  %v530 = vmul.u32 %v526, %v528
  %v531 = vmul.u32 %v526, %v529
  %v532 = vmul.u32 %v527, %v528
  %v533 = vmul.u32 %v527, %v529
  %v534 = vshll.u32 %v531, 16
  %v535 = vshrl.u32 %v531, 16
  %v536 = vshll.u32 %v532, 16
  %v537 = vshrl.u32 %v532, 16
  %vm538 = vc.u32 %v530, %v534
  %v539 = vsel %vm538, 1, 0
  %v540 = vadd.s32 %v530, %v534
  %v541 = vadd.s32 %v533, %v539
  %vm542 = vc.u32 %v540, %v536
  %v543 = vsel %vm542, 1, 0
  %v544 = vadd.s32 %v540, %v536
  %v545 = vadd.s32 %v541, %v543
  %v546 = vadd.s32 %v545, %v535
  %v547 = vadd.s32 %v546, %v537
  %v548 = vmul.u32 %v503, %v494
  %v549 = vadd.s32 %v525, %v544
  %vm550 = vc.u32 %v525, %v544
  %v551 = vadd.s32 %v547, 1
  %v552 = vsel %vm550, %v551, %v547
  %v553 = vadd.s32 %v548, %v552
  %v554 = vadd.s32 %v553, 536870912
  %v555 = vshrl.u32 %v554, 30
  %v556 = vshll.u32 %v555, 30
  %v557 = vsub.s32 %v553, %v556
  %vm558 = vcmp.lt.s32.totalorder %v557, 0
  %v559 = vsub.s32 0, %v557
  %v560 = vsel %vm558, %v559, %v557
  %v561 = vclz %v560
  %v562 = vsub.s32 %v561, 2
  %vm563 = vcmp.gt.s32.totalorder 0, %v562
  %v564 = vsel %vm563, 0, %v562
  %v565 = vsub.s32 32, %v564
  %v566 = vshll.u32 %v557, %v564
  %v567 = vshrl.u32 %v549, %v565
  %v568 = vor.u32 %v566, %v567
  %v569 = vsub.s32 4294967266, %v564
  %v570 = vadd.s32 %v569, 127
  %v571 = vshll.u32 %v570, 23
  %v572 = vor.u32 4788187, %v571
  %v573 = vand.u32 2147483647, %v572
  %v575 = vcvt.s32.f32 %v568
  %v576 = vmul.f32 %v575, %v573
  %v577 = vxor.u32 %v576, 2147483648
  %v578 = vsel %vm457, %v577, %v576
  %v579 = vsub.s32 4, %v555
  %v580 = vsel %vm457, %v579, %v555
  %v581 = vsel %vm456, %v142, %v578
  %v582 = vsel %vm456, 0, %v580
  %v583 = vmul.f32 %v581, %v581
  %v584 = vmul.f32 %v583, -0.001358992
  %v585 = vadd.f32 %v584, 0.041655596
  %v586 = vmul.f32 %v583, %v585
  %v587 = vadd.f32 %v586, -0.4999988
  %v588 = vmul.f32 %v583, %v587
  %v589 = vadd.f32 1.0, %v588
  %v590 = vmul.f32 %v581, %v581
  %v591 = vmul.f32 %v590, -0.00019511016
  %v592 = vadd.f32 %v591, 0.008332121
  %v593 = vmul.f32 %v590, %v592
  %v594 = vadd.f32 %v593, -0.16666654
  %v595 = vmul.f32 %v590, %v594
  %v596 = vadd.f32 %v595, 1.0
  %v597 = vmul.f32 %v596, %v581
  %vm598 = vweird.f32 %v142
  %v599 = vadd.s32 %v582, 3
  %v600 = vand.u32 %v599, 3
  %vm601 = vcmp.lt.s32.totalorder %v600, 2
  %vm602 = vcmp.eq.s32.totalorder %v600, 0
  %v603 = vxor.u32 %v597, 2147483648
  %v604 = vsel %vm602, %v589, %v603
  %vm605 = vcmp.eq.s32.totalorder %v600, 2
  %v606 = vxor.u32 %v589, 2147483648
  %v607 = vsel %vm605, %v606, %v597
  %v608 = vsel %vm601, %v604, %v607
  %v609 = vsel %vm598, nan, %v608
  %v610 = vand.u32 2147483647, %v143
  %vm611 = vcmp.le.f32.partialorder %v610, 0.7853982
  %vm612 = vcmp.lt.s32.totalorder %v143, 0
  %v613 = vand.u32 %v143, 2139095040
  %v614 = vshrl.u32 %v613, 23
  %v615 = vsub.s32 %v614, 127
  %v616 = vand.u32 2147483647, %v143
  %v617 = vand.u32 %v616, 8388607
  %v618 = vor.u32 %v617, 8388608
  %v619 = vsub.s32 0, %v618
  %v620 = vadd.s32 %v615, 1
  %vm621 = vcmp.gt.s32.totalorder %v620, 0
  %v622 = vsel %vm621, %v620, 0
  %v623 = vshrl.u32 %v622, 5
  %v624 = vand.u32 %v622, 31
  %v625 = vsub.s32 32, %v624
  %v626 = vshrl.u32 683565275, %v625
  %v627 = vshll.u32 683565275, %v624
  %v628 = vshrl.u32 2475754826, %v625
  %v629 = vor.u32 %v627, %v628
  %v630 = vshll.u32 2475754826, %v624
  %v631 = vshrl.u32 2131351028, %v625
  %v632 = vor.u32 %v630, %v631
  %v633 = vshll.u32 2131351028, %v624
  %v634 = vshrl.u32 2102212464, %v625
  %v635 = vor.u32 %v633, %v634
  %v636 = vshll.u32 2102212464, %v624
  %v637 = vshrl.u32 920167782, %v625
  %v638 = vor.u32 %v636, %v637
  %v639 = vshll.u32 920167782, %v624
  %v640 = vshrl.u32 1326507024, %v625
  %v641 = vor.u32 %v639, %v640
  %vm642 = vcmp.lt.s32.totalorder %v623, 1
  %vm643 = vcmp.lt.s32.totalorder %v623, 2
  %vm644 = vcmp.lt.s32.totalorder %v623, 3
  %vm645 = vcmp.lt.s32.totalorder %v623, 4
  %v646 = vsel %vm642, %v626, %v629
  %v647 = vsel %vm645, %v635, 2102212464
  %v648 = vsel %vm644, %v632, %v647
  %v649 = vsel %vm643, %v646, %v648
  %v650 = vsel %vm642, %v629, %v632
  %v651 = vsel %vm645, %v638, 920167782
  %v652 = vsel %vm644, %v635, %v651
  %v653 = vsel %vm643, %v650, %v652
  %v654 = vsel %vm642, %v632, %v635
  %v655 = vsel %vm645, %v641, 1326507024
  %v656 = vsel %vm644, %v638, %v655
  %v657 = vsel %vm643, %v654, %v656
  %v658 = vshll.u32 %v618, 8
  %v659 = vand.u32 %v658, 65535
  %v660 = vshrl.u32 %v658, 16
  %v661 = vand.u32 %v657, 65535
  %v662 = vshrl.u32 %v657, 16
  %v663 = vmul.u32 %v659, %v661
  %v664 = vmul.u32 %v659, %v662
  %v665 = vmul.u32 %v660, %v661
  %v666 = vmul.u32 %v660, %v662
  %v667 = vshll.u32 %v664, 16
  %v668 = vshrl.u32 %v664, 16
  %v669 = vshll.u32 %v665, 16
  %v670 = vshrl.u32 %v665, 16
  %vm671 = vc.u32 %v663, %v667
  %v672 = vsel %vm671, 1, 0
  %v673 = vadd.s32 %v663, %v667
  %v674 = vadd.s32 %v666, %v672
  %vm675 = vc.u32 %v673, %v669
  %v676 = vsel %vm675, 1, 0
  %v677 = vadd.s32 %v673, %v669
  %v678 = vadd.s32 %v674, %v676
  %v679 = vadd.s32 %v678, %v668
  %v680 = vadd.s32 %v679, %v670
  %v681 = vand.u32 %v658, 65535
  %v682 = vshrl.u32 %v658, 16
  %v683 = vand.u32 %v653, 65535
  %v684 = vshrl.u32 %v653, 16
  %v685 = vmul.u32 %v681, %v683
  %v686 = vmul.u32 %v681, %v684
  %v687 = vmul.u32 %v682, %v683
  %v688 = vmul.u32 %v682, %v684
  %v689 = vshll.u32 %v686, 16
  %v690 = vshrl.u32 %v686, 16
  %v691 = vshll.u32 %v687, 16
  %v692 = vshrl.u32 %v687, 16
  %vm693 = vc.u32 %v685, %v689
  %v694 = vsel %vm693, 1, 0
  %v695 = vadd.s32 %v685, %v689
  %v696 = vadd.s32 %v688, %v694
  %vm697 = vc.u32 %v695, %v691
  %v698 = vsel %vm697, 1, 0
  %v699 = vadd.s32 %v695, %v691
  %v700 = vadd.s32 %v696, %v698
  %v701 = vadd.s32 %v700, %v690
  %v702 = vadd.s32 %v701, %v692
  %v703 = vmul.u32 %v658, %v649
  %v704 = vadd.s32 %v680, %v699
  %vm705 = vc.u32 %v680, %v699
  %v706 = vadd.s32 %v702, 1
  %v707 = vsel %vm705, %v706, %v702
  %v708 = vadd.s32 %v703, %v707
  %v709 = vadd.s32 %v708, 536870912
  %v710 = vshrl.u32 %v709, 30
  %v711 = vshll.u32 %v710, 30
  %v712 = vsub.s32 %v708, %v711
  %vm713 = vcmp.lt.s32.totalorder %v712, 0
  %v714 = vsub.s32 0, %v712
  %v715 = vsel %vm713, %v714, %v712
  %v716 = vclz %v715
  %v717 = vsub.s32 %v716, 2
  %vm718 = vcmp.gt.s32.totalorder 0, %v717
  %v719 = vsel %vm718, 0, %v717
  %v720 = vsub.s32 32, %v719
  %v721 = vshll.u32 %v712, %v719
  %v722 = vshrl.u32 %v704, %v720
  %v723 = vor.u32 %v721, %v722
  %v724 = vsub.s32 4294967266, %v719
  %v725 = vadd.s32 %v724, 127
  %v726 = vshll.u32 %v725, 23
  %v727 = vor.u32 4788187, %v726
  %v728 = vand.u32 2147483647, %v727
  %v730 = vcvt.s32.f32 %v723
  %v731 = vmul.f32 %v730, %v728
  %v732 = vxor.u32 %v731, 2147483648
  %v733 = vsel %vm612, %v732, %v731
  %v734 = vsub.s32 4, %v710
  %v735 = vsel %vm612, %v734, %v710
  %v736 = vsel %vm611, %v143, %v733
  %v737 = vsel %vm611, 0, %v735
  %v738 = vmul.f32 %v736, %v736
  %v739 = vmul.f32 %v738, -0.001358992
  %v740 = vadd.f32 %v739, 0.041655596
  %v741 = vmul.f32 %v738, %v740
  %v742 = vadd.f32 %v741, -0.4999988
  %v743 = vmul.f32 %v738, %v742
  %v744 = vadd.f32 1.0, %v743
  %v745 = vmul.f32 %v736, %v736
  %v746 = vmul.f32 %v745, -0.00019511016
  %v747 = vadd.f32 %v746, 0.008332121
  %v748 = vmul.f32 %v745, %v747
  %v749 = vadd.f32 %v748, -0.16666654
  %v750 = vmul.f32 %v745, %v749
  %v751 = vadd.f32 %v750, 1.0
  %v752 = vmul.f32 %v751, %v736
  %vm753 = vweird.f32 %v143
  %v754 = vadd.s32 %v737, 3
  %v755 = vand.u32 %v754, 3
  %vm756 = vcmp.lt.s32.totalorder %v755, 2
  %vm757 = vcmp.eq.s32.totalorder %v755, 0
  %v758 = vxor.u32 %v752, 2147483648
  %v759 = vsel %vm757, %v744, %v758
  %vm760 = vcmp.eq.s32.totalorder %v755, 2
  %v761 = vxor.u32 %v744, 2147483648
  %v762 = vsel %vm760, %v761, %v752
  %v763 = vsel %vm756, %v759, %v762
  %v764 = vsel %vm753, nan, %v763
  %v765 = vand.u32 2147483647, %v144
  %vm766 = vcmp.le.f32.partialorder %v765, 0.7853982
  %vm767 = vcmp.lt.s32.totalorder %v144, 0
  %v768 = vand.u32 %v144, 2139095040
  %v769 = vshrl.u32 %v768, 23
  %v770 = vsub.s32 %v769, 127
  %v771 = vand.u32 2147483647, %v144
  %v772 = vand.u32 %v771, 8388607
  %v773 = vor.u32 %v772, 8388608
  %v774 = vsub.s32 0, %v773
  %v775 = vadd.s32 %v770, 1
  %vm776 = vcmp.gt.s32.totalorder %v775, 0
  %v777 = vsel %vm776, %v775, 0
  %v778 = vshrl.u32 %v777, 5
  %v779 = vand.u32 %v777, 31
  %v780 = vsub.s32 32, %v779
  %v781 = vshrl.u32 683565275, %v780
  %v782 = vshll.u32 683565275, %v779
  %v783 = vshrl.u32 2475754826, %v780
  %v784 = vor.u32 %v782, %v783
  %v785 = vshll.u32 2475754826, %v779
  %v786 = vshrl.u32 2131351028, %v780
  %v787 = vor.u32 %v785, %v786
  %v788 = vshll.u32 2131351028, %v779
  %v789 = vshrl.u32 2102212464, %v780
  %v790 = vor.u32 %v788, %v789
  %v791 = vshll.u32 2102212464, %v779
  %v792 = vshrl.u32 920167782, %v780
  %v793 = vor.u32 %v791, %v792
  %v794 = vshll.u32 920167782, %v779
  %v795 = vshrl.u32 1326507024, %v780
  %v796 = vor.u32 %v794, %v795
  %vm797 = vcmp.lt.s32.totalorder %v778, 1
  %vm798 = vcmp.lt.s32.totalorder %v778, 2
  %vm799 = vcmp.lt.s32.totalorder %v778, 3
  %vm800 = vcmp.lt.s32.totalorder %v778, 4
  %v801 = vsel %vm797, %v781, %v784
  %v802 = vsel %vm800, %v790, 2102212464
  %v803 = vsel %vm799, %v787, %v802
  %v804 = vsel %vm798, %v801, %v803
  %v805 = vsel %vm797, %v784, %v787
  %v806 = vsel %vm800, %v793, 920167782
  %v807 = vsel %vm799, %v790, %v806
  %v808 = vsel %vm798, %v805, %v807
  %v809 = vsel %vm797, %v787, %v790
  %v810 = vsel %vm800, %v796, 1326507024
  %v811 = vsel %vm799, %v793, %v810
  %v812 = vsel %vm798, %v809, %v811
  %v813 = vshll.u32 %v773, 8
  %v814 = vand.u32 %v813, 65535
  %v815 = vshrl.u32 %v813, 16
  %v816 = vand.u32 %v812, 65535
  %v817 = vshrl.u32 %v812, 16
  %v818 = vmul.u32 %v814, %v816
  %v819 = vmul.u32 %v814, %v817
  %v820 = vmul.u32 %v815, %v816
  %v821 = vmul.u32 %v815, %v817
  %v822 = vshll.u32 %v819, 16
  %v823 = vshrl.u32 %v819, 16
  %v824 = vshll.u32 %v820, 16
  %v825 = vshrl.u32 %v820, 16
  %vm826 = vc.u32 %v818, %v822
  %v827 = vsel %vm826, 1, 0
  %v828 = vadd.s32 %v818, %v822
  %v829 = vadd.s32 %v821, %v827
  %vm830 = vc.u32 %v828, %v824
  %v831 = vsel %vm830, 1, 0
  %v832 = vadd.s32 %v828, %v824
  %v833 = vadd.s32 %v829, %v831
  %v834 = vadd.s32 %v833, %v823
  %v835 = vadd.s32 %v834, %v825
  %v836 = vand.u32 %v813, 65535
  %v837 = vshrl.u32 %v813, 16
  %v838 = vand.u32 %v808, 65535
  %v839 = vshrl.u32 %v808, 16
  %v840 = vmul.u32 %v836, %v838
  %v841 = vmul.u32 %v836, %v839
  %v842 = vmul.u32 %v837, %v838
  %v843 = vmul.u32 %v837, %v839
  %v844 = vshll.u32 %v841, 16
  %v845 = vshrl.u32 %v841, 16
  %v846 = vshll.u32 %v842, 16
  %v847 = vshrl.u32 %v842, 16
  %vm848 = vc.u32 %v840, %v844
  %v849 = vsel %vm848, 1, 0
  %v850 = vadd.s32 %v840, %v844
  %v851 = vadd.s32 %v843, %v849
  %vm852 = vc.u32 %v850, %v846
  %v853 = vsel %vm852, 1, 0
  %v854 = vadd.s32 %v850, %v846
  %v855 = vadd.s32 %v851, %v853
  %v856 = vadd.s32 %v855, %v845
  %v857 = vadd.s32 %v856, %v847
  %v858 = vmul.u32 %v813, %v804
  %v859 = vadd.s32 %v835, %v854
  %vm860 = vc.u32 %v835, %v854
  %v861 = vadd.s32 %v857, 1
  %v862 = vsel %vm860, %v861, %v857
  %v863 = vadd.s32 %v858, %v862
  %v864 = vadd.s32 %v863, 536870912
  %v865 = vshrl.u32 %v864, 30
  %v866 = vshll.u32 %v865, 30
  %v867 = vsub.s32 %v863, %v866
  %vm868 = vcmp.lt.s32.totalorder %v867, 0
  %v869 = vsub.s32 0, %v867
  %v870 = vsel %vm868, %v869, %v867
  %v871 = vclz %v870
  %v872 = vsub.s32 %v871, 2
  %vm873 = vcmp.gt.s32.totalorder 0, %v872
  %v874 = vsel %vm873, 0, %v872
  %v875 = vsub.s32 32, %v874
  %v876 = vshll.u32 %v867, %v874
  %v877 = vshrl.u32 %v859, %v875
  %v878 = vor.u32 %v876, %v877
  %v879 = vsub.s32 4294967266, %v874
  %v880 = vadd.s32 %v879, 127
  %v881 = vshll.u32 %v880, 23
  %v882 = vor.u32 4788187, %v881
  %v883 = vand.u32 2147483647, %v882
  %v885 = vcvt.s32.f32 %v878
  %v886 = vmul.f32 %v885, %v883
  %v887 = vxor.u32 %v886, 2147483648
  %v888 = vsel %vm767, %v887, %v886
  %v889 = vsub.s32 4, %v865
  %v890 = vsel %vm767, %v889, %v865
  %v891 = vsel %vm766, %v144, %v888
  %v892 = vsel %vm766, 0, %v890
  %v893 = vmul.f32 %v891, %v891
  %v894 = vmul.f32 %v893, -0.001358992
  %v895 = vadd.f32 %v894, 0.041655596
  %v896 = vmul.f32 %v893, %v895
  %v897 = vadd.f32 %v896, -0.4999988
  %v898 = vmul.f32 %v893, %v897
  %v899 = vadd.f32 1.0, %v898
  %v900 = vmul.f32 %v891, %v891
  %v901 = vmul.f32 %v900, -0.00019511016
  %v902 = vadd.f32 %v901, 0.008332121
  %v903 = vmul.f32 %v900, %v902
  %v904 = vadd.f32 %v903, -0.16666654
  %v905 = vmul.f32 %v900, %v904
  %v906 = vadd.f32 %v905, 1.0
  %v907 = vmul.f32 %v906, %v891
  %vm908 = vweird.f32 %v144
  %v909 = vadd.s32 %v892, 3
  %v910 = vand.u32 %v909, 3
  %vm911 = vcmp.lt.s32.totalorder %v910, 2
  %vm912 = vcmp.eq.s32.totalorder %v910, 0
  %v913 = vxor.u32 %v907, 2147483648
  %v914 = vsel %vm912, %v899, %v913
  %vm915 = vcmp.eq.s32.totalorder %v910, 2
  %v916 = vxor.u32 %v899, 2147483648
  %v917 = vsel %vm915, %v916, %v907
  %v918 = vsel %vm911, %v914, %v917
  %v919 = vsel %vm908, nan, %v918
  %v920 = vld [vmem:[%s2] sm:$0xff]
  %v921 = vld [vmem:[%s2 + $0x8] sm:$0xff]
  %v922 = vld [vmem:[%s2 + $0x10] sm:$0xff]
  %v923 = vld [vmem:[%s2 + $0x18] sm:$0xff]
  %v924 = vld [vmem:[%s2 + $0x20] sm:$0x3]
  %926 = vset.pattern.permute.xlu0 0
  %927 = vperm.xlu0 %926, %v920
  %v928 = vpop.permute.xlu0 %927
  %931 = vset.pattern.permute.xlu0 0
  %932 = vperm.xlu0 %931, %v921
  %v933 = vpop.permute.xlu0 %932
  %936 = vset.pattern.permute.xlu0 0
  %937 = vperm.xlu0 %936, %v922
  %v938 = vpop.permute.xlu0 %937
  %941 = vset.pattern.permute.xlu0 0
  %942 = vperm.xlu0 %941, %v923
  %v943 = vpop.permute.xlu0 %942
  %946 = vset.pattern.permute.xlu0 0
  %947 = vperm.xlu0 %946, %v924
  %v948 = vpop.permute.xlu0 %947
  %v950 = vmul.f32 %v299, %v928
  %v951 = vmul.f32 %v454, %v933
  %v952 = vmul.f32 %v609, %v938
  %v953 = vmul.f32 %v764, %v943
  %v954 = vmul.f32 %v919, %v948
  %vm955 = vcmask 809984
  %v957 = vsel %vm955, %v83, 0
  %v960 = vsel %vm955, %v84, 0
  %v963 = vsel %vm955, %v85, 0
  %v966 = vsel %vm955, %v86, 0
  %v969 = vsel %vm955, %v87, 0
  %vm971 = vcmask 1042432
  %v973 = vsel %vm971, %v100, 0
  %975 = vmatpush.msra.mxu0 0.0
  %976 = vmatpush.msra.mxu0 0.0
  %977 = vmatpush.msra.mxu0 0.0
  %978 = vmatpush.msra.mxu0 %v973
  %979 = vmatpush.msra.mxu0 %v99
  %980 = vmatpush.msra.mxu0 %v98
  %981 = vmatpush.msra.mxu0 %v97
  %982 = vmatpush.msra.mxu0 %v96
  %983 = vmatpush.msra.mxu0 %v95
  %984 = vmatpush.msra.mxu0 %v94
  %985 = vmatpush.msra.mxu0 %v93
  %986 = vmatpush.msra.mxu0 %v92
  %987 = vmatpush.msra.mxu0 %v91
  %988 = vmatpush.msra.mxu0 %v90
  %989 = vmatpush.msra.mxu0 %v89
  %990 = vmatpush.msra.mxu0 %v88
  %991 = vmatmul.f32.gmra.mxu0 %v957
  %v992 = vpop.f32.mrf.mxu0
  %v993 = vadd.f32 %v950, %v992
  %994 = vmatmul.f32.gmra.mxu0 %v960
  %v995 = vpop.f32.mrf.mxu0
  %v996 = vadd.f32 %v951, %v995
  %997 = vmatmul.f32.gmra.mxu0 %v963
  %v998 = vpop.f32.mrf.mxu0
  %v999 = vadd.f32 %v952, %v998
  %1000 = vmatmul.f32.gmra.mxu0 %v966
  %v1001 = vpop.f32.mrf.mxu0
  %v1002 = vadd.f32 %v953, %v1001
  %1003 = vmatmul.f32.gmra.mxu0 %v969
  %v1004 = vpop.f32.mrf.mxu0
  %v1005 = vadd.f32 %v954, %v1004
  %1006 = vdwg.mxu0
  %vm1007 = vcmask 261120
  %1008 = vst.msk [vmem:[%s6] sm:$0xff] %vm1007, %v993
  %1009 = vst.msk [vmem:[%s6 + $0x8] sm:$0xff] %vm1007, %v996
  %1010 = vst.msk [vmem:[%s6 + $0x10] sm:$0xff] %vm1007, %v999
  %1011 = vst.msk [vmem:[%s6 + $0x18] sm:$0xff] %vm1007, %v1002
  %vm1012 = vcmask 254976
  %1013 = vst.msk [vmem:[%s6 + $0x20] sm:$0x3] %vm1012, %v1005
  // Predicated region
  $region26: #{_forward_impl.1} parent=0 // pred_check
    _
  $region27: #{_forward_impl.1} parent=0 // pred_check_branch
    %1015 = sbr.rel (0) target = $region29
  $region28: #{_forward_impl.1} parent=0 // pred_region
    _
  $region29: #{_forward_impl.1} parent=0 // pred_fallthru
    _
  // Predicated region
  $region30: #{_forward_impl.1} parent=0 // pred_check
    _
  $region31: #{_forward_impl.1} parent=0 // pred_check_branch
    %1017 = sbr.rel (0) target = $region33
  $region32: #{_forward_impl.1} parent=0 // pred_region
    _
  $region33: #{_forward_impl.1} parent=0 // pred_fallthru
    _

</llo_original>
